<compile_context>
chip_gen: v7x
topology: tpu7x:2x2x1
jax: 0.10.0
libtpu: 0.0.40
codegen_flags: <defaults>
</compile_context>

<pallas_src>
import functools

import jax
import jax.numpy as jnp
from jax.experimental import pallas as pl
from jax.experimental.pallas import tpu as pltpu

_HALO = 128  # lane-aligned halo; supports impulse responses up to K-1 <= 128 taps


def _round_up(x: int, m: int) -> int:
    return ((x + m - 1) // m) * m


def _reverb_kernel(ir_ref, halo_ref, cur_ref, out_ref, win_ref, *,
                   num_taps: int, halo: int, add_dry: bool):
    # ir_ref:   (K,)          SMEM, full impulse response (tap 0 skipped == _mask_dry)
    # halo_ref: (B, halo)     last `halo` samples of the previous tile (block 0 when i == 0)
    # cur_ref:  (B, T)        current tile of dry audio
    # out_ref:  (B, T)        wet (+ dry)
    # win_ref:  (B, halo + T) VMEM scratch window: [previous halo | current tile]
    i = pl.program_id(0)
    T = cur_ref.shape[-1]

    cur = cur_ref[...]                                   # (B, T) float32

    # Assemble the convolution window. For the first tile the "previous"
    # samples are zeros (causal zero padding), so mask the halo there.
    not_first = (i > 0).astype(cur.dtype)
    win_ref[:, :halo] = halo_ref[...] * not_first
    win_ref[:, halo:] = cur

    acc = cur if add_dry else jnp.zeros_like(cur)

    # Causal FIR; tap 0 is skipped, which is exactly the module's _mask_dry.
    for k in range(1, num_taps):
        shifted = win_ref[:, halo - k: halo - k + T]      # audio shifted right by k
        acc = acc + ir_ref[k] * shifted                   # scalar tap from SMEM

    out_ref[...] = acc.astype(out_ref.dtype)


def reverb_forward(audio: jax.Array,
                   impulse_response: jax.Array,
                   add_dry: bool = True,
                   samples_tile: int = 1024) -> jax.Array:
    """JAX/Pallas equivalent of Reverb.forward (trainable=True)."""
    audio = jnp.asarray(audio, jnp.float32)
    B, S = audio.shape
    ir = jnp.asarray(impulse_response, jnp.float32).reshape(-1)
    K = int(ir.shape[0])

    if K - 1 > _HALO:
        # TODO(synk): long impulse responses need a multi-tile halo or an MXU
        # Toeplitz formulation; not implemented in this kernel.
        raise NotImplementedError(
            f"reverb_length={K} > {_HALO + 1} taps not supported by this kernel")

    # Samples tile: multiple of 128, capped for VMEM / vreg pressure.
    T = min(_round_up(samples_tile, 128), _round_up(S, 128))
    S_pad = _round_up(S, T)
    x = audio if S_pad == S else jnp.pad(audio, ((0, 0), (0, S_pad - S)))
    n_tiles = S_pad // T
    blocks_per_tile = T // _HALO

    kernel = functools.partial(
        _reverb_kernel, num_taps=K, halo=_HALO, add_dry=add_dry)

    out = pl.pallas_call(
        kernel,
        out_shape=jax.ShapeDtypeStruct((B, S_pad), jnp.float32),
        grid=(n_tiles,),
        in_specs=[
            # Impulse response: whole (K,) array resident in SMEM, read as scalars.
            pl.BlockSpec(memory_space=pltpu.MemorySpace.SMEM),
            # Halo: the 128 samples just before the current tile (clamped to
            # block 0 for the first tile; masked to zero in-kernel).
            pl.BlockSpec((B, _HALO),
                         lambda i: (0, jnp.maximum(i * blocks_per_tile - 1, 0))),
            # Current tile of dry audio.
            pl.BlockSpec((B, T), lambda i: (0, i)),
        ],
        out_specs=pl.BlockSpec((B, T), lambda i: (0, i)),
        scratch_shapes=[pltpu.VMEM((B, _HALO + T), jnp.float32)],
        compiler_params=pltpu.CompilerParams(
            dimension_semantics=("parallel",),
            vmem_limit_bytes=32 * 1024 * 1024,
        ),
    )(ir, x, x)

    return out if S_pad == S else out[:, :S]


def _fft_convolve_reference(audio: jax.Array, impulse_response: jax.Array,
                            add_dry: bool) -> jax.Array:
    """Pure-JAX mirror of ddsp-style fft_convolve(padding='same', delay_compensation=0)."""
    B, S = audio.shape
    K = impulse_response.shape[-1]
    ir = jnp.tile(impulse_response[None, :], (B, 1)).at[:, 0].set(0.0)
    fft_size = 1
    while fft_size < S + K - 1:
        fft_size *= 2
    audio_fft = jnp.fft.rfft(audio, fft_size)
    ir_fft = jnp.fft.rfft(ir, fft_size)
    conv = jnp.fft.irfft(audio_fft * ir_fft, fft_size)
    wet = conv[:, :S]  # padding='same', delay_compensation=0 -> first S samples
    return wet + audio if add_dry else wet


if __name__ == "__main__":
    key = jax.random.PRNGKey(0)
    k_audio, k_ir = jax.random.split(key)

    batch, samples, reverb_length = 2, 256, 16

    audio = jax.random.normal(k_audio, (batch, samples), dtype=jnp.float32)
    # The module initializes nn.Parameter(torch.zeros(reverb_length)) — zeros
    # would make the kernel a trivial identity, so use deterministic small
    # random taps of the same shape to actually exercise the FIR path.
    impulse_response = 0.1 * jax.random.normal(
        k_ir, (reverb_length,), dtype=jnp.float32)

    out = reverb_forward(audio, impulse_response, add_dry=True)
    out = jax.block_until_ready(out)

    ref = _fft_convolve_reference(audio, impulse_response, add_dry=True)
    err = float(jnp.max(jnp.abs(out - ref)))
    assert jnp.allclose(out, ref, atol=1e-4), f"max abs err {err}"

    print("KERNEL_OK")
</pallas_src>

<mosaic_0001>
module attributes {stable_mosaic.version = 11 : i64} {
  func.func @_reverb_kernel(%arg0: i32, %arg1: memref<16xf32, #tpu.memory_space<smem>>, %arg2: memref<2x128xf32, #tpu.memory_space<vmem>>, %arg3: memref<2x256xf32, #tpu.memory_space<vmem>>, %arg4: memref<2x256xf32, #tpu.memory_space<vmem>>, %arg5: memref<2x384xf32, #tpu.memory_space<vmem>>) attributes {dimension_semantics = [#tpu.dimension_semantics<parallel>], iteration_bounds = array<i64: 1>, scalar_prefetch = 0 : i64, scratch_operands = 1 : i64, tpu.core_type = #tpu.core_type<tc>, window_params = [{transform_indices = @transform_0, window_bounds = array<i64: 16>}, {transform_indices = @transform_1, window_bounds = array<i64: 2, 128>}, {transform_indices = @transform_2, window_bounds = array<i64: 2, 256>}, {transform_indices = @transform_3, window_bounds = array<i64: 2, 256>}]} {
    %c0 = arith.constant 0 : index
    %c0_0 = arith.constant 0 : index
    %0 = vector.load %arg3[%c0, %c0_0] : memref<2x256xf32, #tpu.memory_space<vmem>>, vector<2x256xf32>
    %c0_i32 = arith.constant 0 : i32
    %1 = arith.cmpi sgt, %arg0, %c0_i32 : i32
    %2 = arith.extui %1 : i1 to i32
    %3 = arith.sitofp %2 : i32 to f32
    %c0_1 = arith.constant 0 : index
    %c0_2 = arith.constant 0 : index
    %4 = vector.load %arg2[%c0_1, %c0_2] : memref<2x128xf32, #tpu.memory_space<vmem>>, vector<2x128xf32>
    %5 = vector.broadcast %3 : f32 to vector<2x128xf32>
    %6 = arith.mulf %4, %5 : vector<2x128xf32>
    %c0_3 = arith.constant 0 : index
    %c0_4 = arith.constant 0 : index
    %7 = vector.load %arg5[%c0_3, %c0_4] : memref<2x384xf32, #tpu.memory_space<vmem>>, vector<2x128xf32>
    tpu.vector_store %arg5[%c0_3, %c0_4], %6 {strides = array<i32>} : memref<2x384xf32, #tpu.memory_space<vmem>>, vector<2x128xf32>,
    %c0_5 = arith.constant 0 : index
    %c128 = arith.constant 128 : index
    %8 = vector.load %arg5[%c0_5, %c128] : memref<2x384xf32, #tpu.memory_space<vmem>>, vector<2x256xf32>
    tpu.vector_store %arg5[%c0_5, %c128], %0 {strides = array<i32>} : memref<2x384xf32, #tpu.memory_space<vmem>>, vector<2x256xf32>,
    %c0_6 = arith.constant 0 : index
    %c127 = arith.constant 127 : index
    %9 = vector.load %arg5[%c0_6, %c127] : memref<2x384xf32, #tpu.memory_space<vmem>>, vector<2x256xf32>
    %c1 = arith.constant 1 : index
    %10 = memref.load %arg1[%c1] : memref<16xf32, #tpu.memory_space<smem>>
    %11 = vector.broadcast %10 : f32 to vector<2x256xf32>
    %12 = arith.mulf %11, %9 : vector<2x256xf32>
    %13 = arith.addf %0, %12 : vector<2x256xf32>
    %c0_7 = arith.constant 0 : index
    %c126 = arith.constant 126 : index
    %14 = vector.load %arg5[%c0_7, %c126] : memref<2x384xf32, #tpu.memory_space<vmem>>, vector<2x256xf32>
    %c2 = arith.constant 2 : index
    %15 = memref.load %arg1[%c2] : memref<16xf32, #tpu.memory_space<smem>>
    %16 = vector.broadcast %15 : f32 to vector<2x256xf32>
    %17 = arith.mulf %16, %14 : vector<2x256xf32>
    %18 = arith.addf %13, %17 : vector<2x256xf32>
    %c0_8 = arith.constant 0 : index
    %c125 = arith.constant 125 : index
    %19 = vector.load %arg5[%c0_8, %c125] : memref<2x384xf32, #tpu.memory_space<vmem>>, vector<2x256xf32>
    %c3 = arith.constant 3 : index
    %20 = memref.load %arg1[%c3] : memref<16xf32, #tpu.memory_space<smem>>
    %21 = vector.broadcast %20 : f32 to vector<2x256xf32>
    %22 = arith.mulf %21, %19 : vector<2x256xf32>
    %23 = arith.addf %18, %22 : vector<2x256xf32>
    %c0_9 = arith.constant 0 : index
    %c124 = arith.constant 124 : index
    %24 = vector.load %arg5[%c0_9, %c124] : memref<2x384xf32, #tpu.memory_space<vmem>>, vector<2x256xf32>
    %c4 = arith.constant 4 : index
    %25 = memref.load %arg1[%c4] : memref<16xf32, #tpu.memory_space<smem>>
    %26 = vector.broadcast %25 : f32 to vector<2x256xf32>
    %27 = arith.mulf %26, %24 : vector<2x256xf32>
    %28 = arith.addf %23, %27 : vector<2x256xf32>
    %c0_10 = arith.constant 0 : index
    %c123 = arith.constant 123 : index
    %29 = vector.load %arg5[%c0_10, %c123] : memref<2x384xf32, #tpu.memory_space<vmem>>, vector<2x256xf32>
    %c5 = arith.constant 5 : index
    %30 = memref.load %arg1[%c5] : memref<16xf32, #tpu.memory_space<smem>>
    %31 = vector.broadcast %30 : f32 to vector<2x256xf32>
    %32 = arith.mulf %31, %29 : vector<2x256xf32>
    %33 = arith.addf %28, %32 : vector<2x256xf32>
    %c0_11 = arith.constant 0 : index
    %c122 = arith.constant 122 : index
    %34 = vector.load %arg5[%c0_11, %c122] : memref<2x384xf32, #tpu.memory_space<vmem>>, vector<2x256xf32>
    %c6 = arith.constant 6 : index
    %35 = memref.load %arg1[%c6] : memref<16xf32, #tpu.memory_space<smem>>
    %36 = vector.broadcast %35 : f32 to vector<2x256xf32>
    %37 = arith.mulf %36, %34 : vector<2x256xf32>
    %38 = arith.addf %33, %37 : vector<2x256xf32>
    %c0_12 = arith.constant 0 : index
    %c121 = arith.constant 121 : index
    %39 = vector.load %arg5[%c0_12, %c121] : memref<2x384xf32, #tpu.memory_space<vmem>>, vector<2x256xf32>
    %c7 = arith.constant 7 : index
    %40 = memref.load %arg1[%c7] : memref<16xf32, #tpu.memory_space<smem>>
    %41 = vector.broadcast %40 : f32 to vector<2x256xf32>
    %42 = arith.mulf %41, %39 : vector<2x256xf32>
    %43 = arith.addf %38, %42 : vector<2x256xf32>
    %c0_13 = arith.constant 0 : index
    %c120 = arith.constant 120 : index
    %44 = vector.load %arg5[%c0_13, %c120] : memref<2x384xf32, #tpu.memory_space<vmem>>, vector<2x256xf32>
    %c8 = arith.constant 8 : index
    %45 = memref.load %arg1[%c8] : memref<16xf32, #tpu.memory_space<smem>>
    %46 = vector.broadcast %45 : f32 to vector<2x256xf32>
    %47 = arith.mulf %46, %44 : vector<2x256xf32>
    %48 = arith.addf %43, %47 : vector<2x256xf32>
    %c0_14 = arith.constant 0 : index
    %c119 = arith.constant 119 : index
    %49 = vector.load %arg5[%c0_14, %c119] : memref<2x384xf32, #tpu.memory_space<vmem>>, vector<2x256xf32>
    %c9 = arith.constant 9 : index
    %50 = memref.load %arg1[%c9] : memref<16xf32, #tpu.memory_space<smem>>
    %51 = vector.broadcast %50 : f32 to vector<2x256xf32>
    %52 = arith.mulf %51, %49 : vector<2x256xf32>
    %53 = arith.addf %48, %52 : vector<2x256xf32>
    %c0_15 = arith.constant 0 : index
    %c118 = arith.constant 118 : index
    %54 = vector.load %arg5[%c0_15, %c118] : memref<2x384xf32, #tpu.memory_space<vmem>>, vector<2x256xf32>
    %c10 = arith.constant 10 : index
    %55 = memref.load %arg1[%c10] : memref<16xf32, #tpu.memory_space<smem>>
    %56 = vector.broadcast %55 : f32 to vector<2x256xf32>
    %57 = arith.mulf %56, %54 : vector<2x256xf32>
    %58 = arith.addf %53, %57 : vector<2x256xf32>
    %c0_16 = arith.constant 0 : index
    %c117 = arith.constant 117 : index
    %59 = vector.load %arg5[%c0_16, %c117] : memref<2x384xf32, #tpu.memory_space<vmem>>, vector<2x256xf32>
    %c11 = arith.constant 11 : index
    %60 = memref.load %arg1[%c11] : memref<16xf32, #tpu.memory_space<smem>>
    %61 = vector.broadcast %60 : f32 to vector<2x256xf32>
    %62 = arith.mulf %61, %59 : vector<2x256xf32>
    %63 = arith.addf %58, %62 : vector<2x256xf32>
    %c0_17 = arith.constant 0 : index
    %c116 = arith.constant 116 : index
    %64 = vector.load %arg5[%c0_17, %c116] : memref<2x384xf32, #tpu.memory_space<vmem>>, vector<2x256xf32>
    %c12 = arith.constant 12 : index
    %65 = memref.load %arg1[%c12] : memref<16xf32, #tpu.memory_space<smem>>
    %66 = vector.broadcast %65 : f32 to vector<2x256xf32>
    %67 = arith.mulf %66, %64 : vector<2x256xf32>
    %68 = arith.addf %63, %67 : vector<2x256xf32>
    %c0_18 = arith.constant 0 : index
    %c115 = arith.constant 115 : index
    %69 = vector.load %arg5[%c0_18, %c115] : memref<2x384xf32, #tpu.memory_space<vmem>>, vector<2x256xf32>
    %c13 = arith.constant 13 : index
    %70 = memref.load %arg1[%c13] : memref<16xf32, #tpu.memory_space<smem>>
    %71 = vector.broadcast %70 : f32 to vector<2x256xf32>
    %72 = arith.mulf %71, %69 : vector<2x256xf32>
    %73 = arith.addf %68, %72 : vector<2x256xf32>
    %c0_19 = arith.constant 0 : index
    %c114 = arith.constant 114 : index
    %74 = vector.load %arg5[%c0_19, %c114] : memref<2x384xf32, #tpu.memory_space<vmem>>, vector<2x256xf32>
    %c14 = arith.constant 14 : index
    %75 = memref.load %arg1[%c14] : memref<16xf32, #tpu.memory_space<smem>>
    %76 = vector.broadcast %75 : f32 to vector<2x256xf32>
    %77 = arith.mulf %76, %74 : vector<2x256xf32>
    %78 = arith.addf %73, %77 : vector<2x256xf32>
    %c0_20 = arith.constant 0 : index
    %c113 = arith.constant 113 : index
    %79 = vector.load %arg5[%c0_20, %c113] : memref<2x384xf32, #tpu.memory_space<vmem>>, vector<2x256xf32>
    %c15 = arith.constant 15 : index
    %80 = memref.load %arg1[%c15] : memref<16xf32, #tpu.memory_space<smem>>
    %81 = vector.broadcast %80 : f32 to vector<2x256xf32>
    %82 = arith.mulf %81, %79 : vector<2x256xf32>
    %83 = arith.addf %78, %82 : vector<2x256xf32>
    %c0_21 = arith.constant 0 : index
    %c0_22 = arith.constant 0 : index
    %84 = vector.load %arg4[%c0_21, %c0_22] : memref<2x256xf32, #tpu.memory_space<vmem>>, vector<2x256xf32>
    tpu.vector_store %arg4[%c0_21, %c0_22], %83 {strides = array<i32>} : memref<2x256xf32, #tpu.memory_space<vmem>>, vector<2x256xf32>,
    return
  }
  func.func @transform_0(%arg0: i32) -> i32 {
    %c0_i32 = arith.constant 0 : i32
    %c0_i32_0 = arith.constant 0 : i32
    return %c0_i32 : i32
  }
  func.func @transform_1(%arg0: i32) -> (i32, i32) {
    %c2_i32 = arith.constant 2 : i32
    %0 = arith.muli %arg0, %c2_i32 : i32
    %c1_i32 = arith.constant 1 : i32
    %1 = arith.subi %0, %c1_i32 : i32
    %c0_i32 = arith.constant 0 : i32
    %2 = arith.maxsi %1, %c0_i32 : i32
    %c0_i32_0 = arith.constant 0 : i32
    %c0_i32_1 = arith.constant 0 : i32
    return %c0_i32_0, %2 : i32, i32
  }
  func.func @transform_2(%arg0: i32) -> (i32, i32) {
    %c0_i32 = arith.constant 0 : i32
    %c0_i32_0 = arith.constant 0 : i32
    return %c0_i32, %arg0 : i32, i32
  }
  func.func @transform_3(%arg0: i32) -> (i32, i32) {
    %c0_i32 = arith.constant 0 : i32
    %c0_i32_0 = arith.constant 0 : i32
    return %c0_i32, %arg0 : i32, i32
  }
}

</mosaic_0001>

<llo_original>
// kernel: tpu_custom_call.1
$region0: #{tpu_custom_call.1}
  #allocation0 [shape = 'u32[]', space=smem, size = 0x4, offset = 0x4, fixed_abs, tag = 'smem constant byte address 0x4 - core index']
  #allocation1 [shape = 'u32[144,128]{1,0:T(1,128)}', space=vmem, size = 0x12000, scoped, tag = 'internal scratch']
  #allocation2 [shape = 'f32[2,384]{1,0:T(2,128)}', space=vmem, size = 0xc00, scoped, tag = 'scratch operand']
  %s0 = inlined_call_operand.hbm [shape: f32[16], index: 0, kind: input, shape index: {}]
  %s1 = inlined_call_operand.hbm [shape: f32[2,256], index: 1, kind: input, shape index: {}]
  %s2 = inlined_call_operand.vmem [shape: f32[2,256], index: 2, kind: input, shape index: {}]
  %s3 = inlined_call_operand.hbm [shape: f32[2,256], index: 3, kind: output, shape index: {}]
  %s4 = sld [smem:[#allocation0]]
  $region30: #{tpu_custom_call.1} parent=0
    _
  %s6 = ssub.s32 1, %s4
  %s7 = scalar_select 0, %s6, %s4
  $region1: #{tpu_custom_call.1} parent=0
    #allocation3 [shape = 'u8[512]{0}', space=smem, size = 0x200, scoped, tag = 'input window, operand 0, single buffered']
    #allocation4 [shape = 's32[1]{0}', space=sflag, size = 0x4, scoped, tag = 'scoped memory for tpu_custom_call.1']
    #allocation5 [shape = 's32[1]{0}', space=sflag, size = 0x4, scoped, tag = 'scoped memory for tpu_custom_call.1']
    #allocation6 [shape = 's32[1]{0}', space=sflag, size = 0x4, scoped, tag = 'scoped memory for tpu_custom_call.1']
    #allocation7 [shape = 'u8[1024]{0}', space=vmem, size = 0x400, scoped, tag = 'input window, operand 1, single buffered']
    #allocation8 [shape = 'u8[2048]{0}', space=vmem, size = 0x800, scoped, tag = 'output window, operand 0, single buffered']
    %8 = vsyncpa [#allocation6], 0
    %9 = vsyncpa [#allocation4], 0
    %10 = vsyncpa [#allocation5], 0
    // Predicated region
    $region2: #{tpu_custom_call.1} parent=1 // pred_check
      _
    $region3: #{tpu_custom_call.1} parent=1 // pred_check_branch
      %12 = sbr.rel (0) target = $region5
    $region4: #{tpu_custom_call.1} parent=1 // pred_region
      %s14 = ssub.s32 16, 16
      %15 = vsyncadd [#allocation6], %s14
      %18 = dma.hbm_to_smem %s0, 16, [#allocation3], [#allocation6]
    $region5: #{tpu_custom_call.1} parent=1 // pred_fallthru
      _
    // Predicated region
    $region6: #{tpu_custom_call.1} parent=1 // pred_check
      _
    $region7: #{tpu_custom_call.1} parent=1 // pred_check_branch
      %20 = sbr.rel (0) target = $region9
    $region8: #{tpu_custom_call.1} parent=1 // pred_region
      %s21 = smul.u32 0, 2
      %s22 = ssub.s32 %s21, 1
      %p23 = scmp.gt.s32.totalorder %s22, 0
      %s24 = scalar_select %p23, %s22, 0
      %s26 = ssub.s32 32, 32
      %27 = vsyncadd [#allocation4], %s26
      %s28 = smul.addr %s24, 32
      %s29 = scalar_lea.hbm %s1, %s28
      %s31 = sshll.u32 [#allocation7], 4
      %s32 = int_to_ptr.vmem [resolvable:$true] %s31
      %34 = dma.hbm_to_vmem [thread:$0]  %s29, 32, %s32, [#allocation4]
    $region9: #{tpu_custom_call.1} parent=1 // pred_fallthru
      _
    // Predicated region
    $region10: #{tpu_custom_call.1} parent=1 // pred_check
      _
    $region11: #{tpu_custom_call.1} parent=1 // pred_check_branch
      %36 = sbr.rel (0) target = $region13
    $region12: #{tpu_custom_call.1} parent=1 // pred_region
      _
    $region13: #{tpu_custom_call.1} parent=1 // pred_fallthru
      _
    // Predicated region
    $region14: #{tpu_custom_call.1} parent=1 // pred_check
      _
    $region15: #{tpu_custom_call.1} parent=1 // pred_check_branch
      %38 = sbr.rel (0) target = $region17
    $region16: #{tpu_custom_call.1} parent=1 // pred_region
      %39 = dma.done [#allocation6], 16
    $region17: #{tpu_custom_call.1} parent=1 // pred_fallthru
      _
    // Predicated region
    $region18: #{tpu_custom_call.1} parent=1 // pred_check
      _
    $region19: #{tpu_custom_call.1} parent=1 // pred_check_branch
      %41 = sbr.rel (0) target = $region21
    $region20: #{tpu_custom_call.1} parent=1 // pred_region
      %42 = dma.done [#allocation4], 32
    $region21: #{tpu_custom_call.1} parent=1 // pred_fallthru
      _
    %43 = sfence
    %s44 = smul.u32 0, 2
    %s45 = ssub.s32 %s44, 1
    %p46 = scmp.gt.s32.totalorder %s45, 0
    %s47 = scalar_select %p46, %s45, 0
    %v48 = vld [vmem:[%s2] sm:$0xf]
    %p49 = scmp.gt.s32.totalorder 0, 0
    %s50 = scalar_select %p49, 1, 0
    %s51 = scvt.s32.f32 %s50
    %v52 = vld [vmem:[#allocation7] sm:$0x3]
    %v53 = vstv %s51
    %v54 = vmul.f32 %v52, %v53
    %55 = vst [vmem:[#allocation2] sm:$0x3] %v54
    %56 = vst [vmem:[#allocation2 + $0x2] sm:$0xf] %v48
    %v57 = vld [vmem:[#allocation2] sm:$0x3f]
    %s58 = sld [smem:[#allocation3 + $0x1]]
    %v59 = vstv %s58
    %v60 = vmul.f32 %v59, %v57
    %62 = vrot.lane.b32.xlu0 %v60, 1
    %v63 = vpop.permute.xlu0 %62
    %v64 = vrot.slane %v63, 2
    %vm65 = vcmask 7168
    %v66 = vsel %vm65, %v63, %v64
    %v68 = vadd.f32 %v48, %v66
    %s69 = sld [smem:[#allocation3 + $0x2]]
    %v70 = vstv %s69
    %v71 = vmul.f32 %v70, %v57
    %73 = vrot.lane.b32.xlu0 %v71, 2
    %v74 = vpop.permute.xlu0 %73
    %v75 = vrot.slane %v74, 2
    %vm76 = vcmask 15360
    %v77 = vsel %vm76, %v74, %v75
    %v79 = vadd.f32 %v68, %v77
    %s80 = sld [smem:[#allocation3 + $0x3]]
    %v81 = vstv %s80
    %v82 = vmul.f32 %v81, %v57
    %84 = vrot.lane.b32.xlu0 %v82, 3
    %v85 = vpop.permute.xlu0 %84
    %v86 = vrot.slane %v85, 2
    %vm87 = vcmask 23552
    %v88 = vsel %vm87, %v85, %v86
    %v90 = vadd.f32 %v79, %v88
    %s91 = sld [smem:[#allocation3 + $0x4]]
    %v92 = vstv %s91
    %v93 = vmul.f32 %v92, %v57
    %95 = vrot.lane.b32.xlu0 %v93, 4
    %v96 = vpop.permute.xlu0 %95
    %v97 = vrot.slane %v96, 2
    %vm98 = vcmask 31744
    %v99 = vsel %vm98, %v96, %v97
    %v101 = vadd.f32 %v90, %v99
    %s102 = sld [smem:[#allocation3 + $0x5]]
    %v103 = vstv %s102
    %v104 = vmul.f32 %v103, %v57
    %106 = vrot.lane.b32.xlu0 %v104, 5
    %v107 = vpop.permute.xlu0 %106
    %v108 = vrot.slane %v107, 2
    %vm109 = vcmask 39936
    %v110 = vsel %vm109, %v107, %v108
    %v112 = vadd.f32 %v101, %v110
    %s113 = sld [smem:[#allocation3 + $0x6]]
    %v114 = vstv %s113
    %v115 = vmul.f32 %v114, %v57
    %117 = vrot.lane.b32.xlu0 %v115, 6
    %v118 = vpop.permute.xlu0 %117
    %v119 = vrot.slane %v118, 2
    %vm120 = vcmask 48128
    %v121 = vsel %vm120, %v118, %v119
    %v123 = vadd.f32 %v112, %v121
    %s124 = sld [smem:[#allocation3 + $0x7]]
    %v125 = vstv %s124
    %v126 = vmul.f32 %v125, %v57
    %128 = vrot.lane.b32.xlu0 %v126, 7
    %v129 = vpop.permute.xlu0 %128
    %v130 = vrot.slane %v129, 2
    %vm131 = vcmask 56320
    %v132 = vsel %vm131, %v129, %v130
    %v134 = vadd.f32 %v123, %v132
    %s135 = sld [smem:[#allocation3 + $0x8]]
    %v136 = vstv %s135
    %v137 = vmul.f32 %v136, %v57
    %139 = vrot.lane.b32.xlu0 %v137, 8
    %v140 = vpop.permute.xlu0 %139
    %v141 = vrot.slane %v140, 2
    %vm142 = vcmask 64512
    %v143 = vsel %vm142, %v140, %v141
    %v145 = vadd.f32 %v134, %v143
    %s146 = sld [smem:[#allocation3 + $0x9]]
    %v147 = vstv %s146
    %v148 = vmul.f32 %v147, %v57
    %150 = vrot.lane.b32.xlu0 %v148, 9
    %v151 = vpop.permute.xlu0 %150
    %v152 = vrot.slane %v151, 2
    %vm153 = vcmask 72704
    %v154 = vsel %vm153, %v151, %v152
    %v156 = vadd.f32 %v145, %v154
    %s157 = sld [smem:[#allocation3 + $0xa]]
    %v158 = vstv %s157
    %v159 = vmul.f32 %v158, %v57
    %161 = vrot.lane.b32.xlu0 %v159, 10
    %v162 = vpop.permute.xlu0 %161
    %v163 = vrot.slane %v162, 2
    %vm164 = vcmask 80896
    %v165 = vsel %vm164, %v162, %v163
    %v167 = vadd.f32 %v156, %v165
    %s168 = sld [smem:[#allocation3 + $0xb]]
    %v169 = vstv %s168
    %v170 = vmul.f32 %v169, %v57
    %172 = vrot.lane.b32.xlu0 %v170, 11
    %v173 = vpop.permute.xlu0 %172
    %v174 = vrot.slane %v173, 2
    %vm175 = vcmask 89088
    %v176 = vsel %vm175, %v173, %v174
    %v178 = vadd.f32 %v167, %v176
    %s179 = sld [smem:[#allocation3 + $0xc]]
    %v180 = vstv %s179
    %v181 = vmul.f32 %v180, %v57
    %183 = vrot.lane.b32.xlu0 %v181, 12
    %v184 = vpop.permute.xlu0 %183
    %v185 = vrot.slane %v184, 2
    %vm186 = vcmask 97280
    %v187 = vsel %vm186, %v184, %v185
    %v189 = vadd.f32 %v178, %v187
    %s190 = sld [smem:[#allocation3 + $0xd]]
    %v191 = vstv %s190
    %v192 = vmul.f32 %v191, %v57
    %194 = vrot.lane.b32.xlu0 %v192, 13
    %v195 = vpop.permute.xlu0 %194
    %v196 = vrot.slane %v195, 2
    %vm197 = vcmask 105472
    %v198 = vsel %vm197, %v195, %v196
    %v200 = vadd.f32 %v189, %v198
    %s201 = sld [smem:[#allocation3 + $0xe]]
    %v202 = vstv %s201
    %v203 = vmul.f32 %v202, %v57
    %205 = vrot.lane.b32.xlu0 %v203, 14
    %v206 = vpop.permute.xlu0 %205
    %v207 = vrot.slane %v206, 2
    %vm208 = vcmask 113664
    %v209 = vsel %vm208, %v206, %v207
    %v211 = vadd.f32 %v200, %v209
    %s212 = sld [smem:[#allocation3 + $0xf]]
    %v213 = vstv %s212
    %v214 = vmul.f32 %v213, %v57
    %216 = vrot.lane.b32.xlu0 %v214, 15
    %v217 = vpop.permute.xlu0 %216
    %v218 = vrot.slane %v217, 2
    %vm219 = vcmask 121856
    %v220 = vsel %vm219, %v217, %v218
    %v222 = vadd.f32 %v211, %v220
    %223 = vst [vmem:[#allocation8] sm:$0xf] %v222
    // Predicated region
    $region22: #{tpu_custom_call.1} parent=1 // pred_check
      _
    $region23: #{tpu_custom_call.1} parent=1 // pred_check_branch
      %225 = sbr.rel (0) target = $region25
    $region24: #{tpu_custom_call.1} parent=1 // pred_region
      %s227 = ssub.s32 64, 64
      %228 = vsyncadd [#allocation5], %s227
      %s230 = sshll.u32 [#allocation8], 4
      %s231 = int_to_ptr.vmem [resolvable:$true] %s230
      %233 = dma.vmem_to_hbm [thread:$0]  %s231, 64, %s3, [#allocation5]
    $region25: #{tpu_custom_call.1} parent=1 // pred_fallthru
      _
    // Predicated region
    $region26: #{tpu_custom_call.1} parent=1 // pred_check
      _
    $region27: #{tpu_custom_call.1} parent=1 // pred_check_branch
      %235 = sbr.rel (0) target = $region29
    $region28: #{tpu_custom_call.1} parent=1 // pred_region
      %236 = dma.done [#allocation5], 64
    $region29: #{tpu_custom_call.1} parent=1 // pred_fallthru
      _
    %237 = vsyncpa [#allocation4], 1
    %238 = vsyncpa [#allocation5], 1
    %239 = vsyncpa [#allocation6], 1

</llo_original>
